<compile_context>
chip_gen: v7x
topology: tpu7x:2x2x1
jax: 0.10.0
libtpu: 0.0.40
codegen_flags: <defaults>
</compile_context>

<pallas_src>
import functools
import math

import jax
import jax.numpy as jnp
from jax.experimental import pallas as pl
from jax.experimental.pallas import tpu as pltpu

_LANES = 128
_MIB = 1024 * 1024


def _round_up(x: int, m: int) -> int:
    return ((x + m - 1) // m) * m


def _sublanes_for(dtype) -> int:
    """Packed sublane count: 8 for 4-byte, 16 for 2-byte, 32 for 1-byte dtypes."""
    itemsize = jnp.dtype(dtype).itemsize
    return 8 * max(1, 4 // itemsize)


@functools.lru_cache(maxsize=1)
def _tpu_config():
    """Generation-aware tuning knobs derived from the chip's VMEM capacity."""
    vmem_cap = 128 * _MIB
    try:
        vmem_cap = int(pltpu.get_tpu_info().vmem_capacity_bytes)
    except Exception:
        pass
    if vmem_cap <= 64 * _MIB:
        # v7x-class: 64 MiB VMEM per TensorCore, 2 TensorCores per chip.
        return {"vmem_cap": vmem_cap, "num_cores": 2,
                "target_block_bytes": 8 * _MIB}
    # v5e / v6e: 128 MiB VMEM, single TensorCore.
    return {"vmem_cap": vmem_cap, "num_cores": 1,
            "target_block_bytes": 16 * _MIB}


def _apply_act(x, act_type: str):
    """Elementwise activation math (VPU/EUP inside the kernel)."""
    if act_type == "relu":
        return jnp.maximum(x, 0.0)
    elif act_type == "relu6":
        return jnp.clip(x, 0.0, 6.0)
    elif act_type == "sigmoid":
        return jax.nn.sigmoid(x)
    elif act_type == "hardsigmoid":
        # F.relu6(x + 3) / 6
        return jnp.clip(x + 3.0, 0.0, 6.0) * (1.0 / 6.0)
    elif act_type == "hardswish":
        # x * relu6(x + 3) / 6
        return x * jnp.clip(x + 3.0, 0.0, 6.0) * (1.0 / 6.0)
    elif act_type == "leakyrelu":
        # nn.LeakyReLU default negative_slope = 0.01
        return jnp.where(x >= 0.0, x, 0.01 * x)
    elif act_type == "gelu":
        # F.gelu default: exact erf formulation
        return 0.5 * x * (1.0 + jax.lax.erf(x * (1.0 / math.sqrt(2.0))))
    elif act_type == "swish":
        return x * jax.nn.sigmoid(x)
    else:
        raise NotImplementedError(act_type)


def _activation_kernel(x_ref, o_ref, *, act_type: str, compute_dtype):
    x = x_ref[...].astype(compute_dtype)
    o_ref[...] = _apply_act(x, act_type).astype(o_ref.dtype)


class Activation:
    """JAX/Pallas port of ppocr Activation (elementwise; `inplace` is a no-op)."""

    _SUPPORTED = (
        "relu", "relu6", "sigmoid", "hardsigmoid",
        "hardswish", "leakyrelu", "gelu", "swish",
    )

    def __init__(self, act_type: str, inplace: bool = True):
        act_type = act_type.lower()
        if act_type not in self._SUPPORTED:
            raise NotImplementedError(act_type)
        self.act_type = act_type
        self.inplace = inplace  # no-op in JAX (functional semantics)
        # TODO(synk): input_output_aliases={0: 0} would mirror `inplace=True`
        # but can force a defensive copy when the input is not donated, so we
        # keep the functional form.

    def _compute_dtype(self, dtype):
        if dtype == jnp.float32:
            return jnp.float32
        if (jnp.issubdtype(dtype, jnp.floating)
                and jnp.dtype(dtype).itemsize == 2
                and self.act_type != "gelu"):
            # Native bf16/f16 compute keeps the kernel on the HBM roofline on
            # v6e/v7x (their VPU/EUP do bf16); Mosaic widens on v5e, so this
            # is safe everywhere.  gelu stays f32 for exact-erf parity.
            return dtype
        return jnp.float32

    def __call__(self, x):
        orig_shape = x.shape
        dtype = x.dtype
        if x.size == 0:
            return x

        itemsize = jnp.dtype(dtype).itemsize
        sublanes = _sublanes_for(dtype)
        compute_dtype = self._compute_dtype(dtype)

        flat = x.reshape(-1)
        n = flat.shape[0]

        # The kernel only covers the 128-aligned bulk; the (<128-element) tail
        # is computed with plain jnp.  No jnp.pad / trailing-slice HBM passes.
        n_bulk = n - (n % _LANES)
        if n_bulk == 0:
            y = _apply_act(flat.astype(compute_dtype), self.act_type)
            return y.astype(dtype).reshape(orig_shape)

        bulk = flat[:n_bulk].reshape(-1, _LANES)
        rows = bulk.shape[0]

        cfg = _tpu_config()
        target_rows = max(
            sublanes,
            (cfg["target_block_bytes"] // (_LANES * itemsize)) // sublanes * sublanes)

        if rows <= sublanes:
            # Tiny input: block equals the full array extent (allowed).
            block_rows, grid = rows, 1
        else:
            rows_ceil = _round_up(rows, sublanes)
            num_blocks = pl.cdiv(rows, target_rows)
            if cfg["num_cores"] > 1:
                # Balance near-equal blocks across both v7x TensorCores.
                num_blocks = _round_up(num_blocks, cfg["num_cores"])
            block_rows = min(_round_up(pl.cdiv(rows, num_blocks), sublanes),
                             rows_ceil)
            grid = pl.cdiv(rows, block_rows)  # partial last block is masked

        # VMEM budget: in + out, each double-buffered, plus headroom; keep
        # safely under the chip's physical VMEM.
        block_bytes = block_rows * _LANES * itemsize
        vmem_limit = max(32 * _MIB,
                         min(cfg["vmem_cap"] - 16 * _MIB,
                             4 * block_bytes + 8 * _MIB))

        kernel = functools.partial(
            _activation_kernel, act_type=self.act_type, compute_dtype=compute_dtype)

        out_bulk = pl.pallas_call(
            kernel,
            out_shape=jax.ShapeDtypeStruct((rows, _LANES), dtype),
            grid=(grid,),
            in_specs=[pl.BlockSpec((block_rows, _LANES), lambda i: (i, 0))],
            out_specs=pl.BlockSpec((block_rows, _LANES), lambda i: (i, 0)),
            compiler_params=pltpu.CompilerParams(
                dimension_semantics=("parallel",),
                vmem_limit_bytes=int(vmem_limit),
            ),
        )(bulk)

        if n_bulk == n:
            return out_bulk.reshape(orig_shape)

        tail = flat[n_bulk:]
        out_tail = _apply_act(tail.astype(compute_dtype), self.act_type).astype(dtype)
        return jnp.concatenate([out_bulk.reshape(-1), out_tail]).reshape(orig_shape)


def _reference(x, act_type, compute_dtype=jnp.float32):
    return _apply_act(x.astype(compute_dtype), act_type).astype(x.dtype)


if __name__ == "__main__":
    key = jax.random.PRNGKey(0)
    acts = ("relu", "relu6", "sigmoid", "hardsigmoid",
            "hardswish", "leakyrelu", "gelu", "swish")
    ok = True

    # Main NCHW case (128-aligned bulk, f32).
    x = jax.random.normal(key, (2, 4, 16, 16), dtype=jnp.float32) * 3.0
    for act_type in acts:
        y = jax.block_until_ready(Activation(act_type)(x))
        y_ref = _reference(x, act_type)
        if not jnp.allclose(y, y_ref, atol=1e-5, rtol=1e-5):
            ok = False
            print(f"MISMATCH for {act_type} (f32 aligned path)")

    # Ragged case: exercises the masked partial last block + jnp tail path.
    x_ragged = jax.random.normal(key, (3, 5, 7, 11), dtype=jnp.float32) * 3.0
    for act_type in ("hardswish", "gelu", "leakyrelu"):
        y = jax.block_until_ready(Activation(act_type)(x_ragged))
        y_ref = _reference(x_ragged, act_type)
        if not jnp.allclose(y, y_ref, atol=1e-5, rtol=1e-5):
            ok = False
            print(f"MISMATCH for {act_type} (ragged/tail path)")

    # bf16 case: cheap acts + sigmoid/swish computed natively in bf16,
    # gelu kept in f32.
    x_bf16 = (jax.random.normal(key, (2, 8, 16, 16), dtype=jnp.float32) * 3.0
              ).astype(jnp.bfloat16)
    for act_type in ("hardswish", "swish", "sigmoid", "gelu"):
        y = jax.block_until_ready(Activation(act_type)(x_bf16))
        y_ref = _reference(x_bf16, act_type)
        if not jnp.allclose(y.astype(jnp.float32), y_ref.astype(jnp.float32),
                            atol=5e-2, rtol=5e-2):
            ok = False
            print(f"MISMATCH for {act_type} (bf16 path)")

    if ok:
        print("KERNEL_OK")
</pallas_src>

<mosaic_0001>
module attributes {stable_mosaic.version = 11 : i64} {
  func.func @_activation_kernel(%arg0: i32, %arg1: memref<16x128xf32, #tpu.memory_space<vmem>>, %arg2: memref<16x128xf32, #tpu.memory_space<vmem>>) attributes {dimension_semantics = [#tpu.dimension_semantics<parallel>], iteration_bounds = array<i64: 1>, scalar_prefetch = 0 : i64, scratch_operands = 0 : i64, tpu.core_type = #tpu.core_type<tc>, window_params = [{transform_indices = @transform_0, window_bounds = array<i64: 16, 128>}, {transform_indices = @transform_1, window_bounds = array<i64: 16, 128>}]} {
    %c0 = arith.constant 0 : index
    %c0_0 = arith.constant 0 : index
    %0 = vector.load %arg1[%c0, %c0_0] : memref<16x128xf32, #tpu.memory_space<vmem>>, vector<16x128xf32>
    %cst = arith.constant 0.000000e+00 : f32
    %1 = vector.broadcast %cst : f32 to vector<16x128xf32>
    %2 = arith.maximumf %0, %1 : vector<16x128xf32>
    %c0_1 = arith.constant 0 : index
    %c0_2 = arith.constant 0 : index
    %3 = vector.load %arg2[%c0_1, %c0_2] : memref<16x128xf32, #tpu.memory_space<vmem>>, vector<16x128xf32>
    tpu.vector_store %arg2[%c0_1, %c0_2], %2 {strides = array<i32>} : memref<16x128xf32, #tpu.memory_space<vmem>>, vector<16x128xf32>,
    return
  }
  func.func @transform_0(%arg0: i32) -> (i32, i32) {
    %c0_i32 = arith.constant 0 : i32
    %c0_i32_0 = arith.constant 0 : i32
    return %arg0, %c0_i32 : i32, i32
  }
  func.func @transform_1(%arg0: i32) -> (i32, i32) {
    %c0_i32 = arith.constant 0 : i32
    %c0_i32_0 = arith.constant 0 : i32
    return %arg0, %c0_i32 : i32, i32
  }
}

</mosaic_0001>

<llo_original>
// kernel: tpu_custom_call.1
$region0: #{tpu_custom_call.1}
  #allocation0 [shape = 'u32[]', space=smem, size = 0x4, offset = 0x4, fixed_abs, tag = 'smem constant byte address 0x4 - core index']
  #allocation1 [shape = 'u32[144,128]{1,0:T(1,128)}', space=vmem, size = 0x12000, scoped, tag = 'internal scratch']
  %s0 = inlined_call_operand.hbm [shape: f32[16,128], index: 0, kind: input, shape index: {}]
  %s1 = inlined_call_operand.hbm [shape: f32[16,128], index: 1, kind: output, shape index: {}]
  %s2 = sld [smem:[#allocation0]]
  $region18: #{tpu_custom_call.1} parent=0
    _
  %s4 = ssub.s32 1, %s2
  %s5 = scalar_select 0, %s4, %s2
  $region1: #{tpu_custom_call.1} parent=0
    #allocation2 [shape = 'u8[8192]{0}', space=vmem, size = 0x2000, scoped, tag = 'input window, operand 0, single buffered']
    #allocation3 [shape = 's32[1]{0}', space=sflag, size = 0x4, scoped, tag = 'scoped memory for tpu_custom_call.1']
    #allocation4 [shape = 's32[1]{0}', space=sflag, size = 0x4, scoped, tag = 'scoped memory for tpu_custom_call.1']
    #allocation5 [shape = 'u8[8192]{0}', space=vmem, size = 0x2000, scoped, tag = 'output window, operand 0, single buffered']
    %6 = vsyncpa [#allocation3], 0
    %7 = vsyncpa [#allocation4], 0
    // Predicated region
    $region2: #{tpu_custom_call.1} parent=1 // pred_check
      _
    $region3: #{tpu_custom_call.1} parent=1 // pred_check_branch
      %9 = sbr.rel (0) target = $region5
    $region4: #{tpu_custom_call.1} parent=1 // pred_region
      %s11 = ssub.s32 256, 256
      %12 = vsyncadd [#allocation3], %s11
      %s13 = sshll.u32 [#allocation2], 4
      %s14 = int_to_ptr.vmem [resolvable:$true] %s13
      %19 = dma.hbm_to_vmem [thread:$0]  %s0, 256, %s14, [#allocation3], 128, 128, 8
    $region5: #{tpu_custom_call.1} parent=1 // pred_fallthru
      _
    // Predicated region
    $region6: #{tpu_custom_call.1} parent=1 // pred_check
      _
    $region7: #{tpu_custom_call.1} parent=1 // pred_check_branch
      %21 = sbr.rel (0) target = $region9
    $region8: #{tpu_custom_call.1} parent=1 // pred_region
      %22 = dma.done [#allocation3], 256
    $region9: #{tpu_custom_call.1} parent=1 // pred_fallthru
      _
    %v23 = vld [vmem:[#allocation2] sm:$0xff]
    %v24 = vld [vmem:[#allocation2 + $0x8] sm:$0xff]
    %v25 = vmax.f32 %v23, 0.0
    %v26 = vmax.f32 %v24, 0.0
    %27 = vst [vmem:[#allocation5] sm:$0xff] %v25
    %28 = vst [vmem:[#allocation5 + $0x8] sm:$0xff] %v26
    // Predicated region
    $region10: #{tpu_custom_call.1} parent=1 // pred_check
      _
    $region11: #{tpu_custom_call.1} parent=1 // pred_check_branch
      %30 = sbr.rel (0) target = $region13
    $region12: #{tpu_custom_call.1} parent=1 // pred_region
      %s32 = ssub.s32 256, 256
      %33 = vsyncadd [#allocation4], %s32
      %s34 = sshll.u32 [#allocation5], 4
      %s35 = int_to_ptr.vmem [resolvable:$true] %s34
      %40 = dma.vmem_to_hbm [thread:$0]  %s35, 256, %s1, [#allocation4], 128, 128, 8
    $region13: #{tpu_custom_call.1} parent=1 // pred_fallthru
      _
    // Predicated region
    $region14: #{tpu_custom_call.1} parent=1 // pred_check
      _
    $region15: #{tpu_custom_call.1} parent=1 // pred_check_branch
      %42 = sbr.rel (0) target = $region17
    $region16: #{tpu_custom_call.1} parent=1 // pred_region
      %43 = dma.done [#allocation4], 256
    $region17: #{tpu_custom_call.1} parent=1 // pred_fallthru
      _
    %44 = vsyncpa [#allocation3], 1
    %45 = vsyncpa [#allocation4], 1

</llo_original>
